<compile_context>
chip_gen: v5e
topology: v5e:2x2
jax: 0.10.0
libtpu: 0.0.40
codegen_flags: <defaults>
</compile_context>

<pallas_src>
import jax
import jax.numpy as jnp
import numpy as np
from jax.experimental import pallas as pl
from jax.experimental.pallas import tpu as pltpu

LANE = 128
SUBLANE = 8


def _round_up(x, m):
    return (x + m - 1) // m * m


def gru_embedding_kernel(h_ref,    # VMEM (TB, Dp)      hidden-state tile
                         vx_ref,   # VMEM (TB, 3*Dp)    gathered Wx0[X] + Bh0 tile
                         wrz_ref,  # VMEM (Dp, 2*Dp)    resident across grid steps
                         wh_ref,   # VMEM (Dp, Dp)      resident across grid steps
                         o_ref):   # VMEM (TB, Dp)      output tile
    Dp = h_ref.shape[1]
    mxu_dtype = wrz_ref.dtype          # f32 by default, bf16 if pre-cast in wrapper

    H = h_ref[...]

    # Vrz = H @ Wrz0 on the MXU.
    vrz = jnp.dot(H.astype(mxu_dtype), wrz_ref[...],
                  preferred_element_type=jnp.float32)             # (TB, 2*Dp)

    vx = vx_ref[...]                   # (TB, 3*Dp); Bh0 already folded in
    vx_x = vx[:, :Dp]                  # all slices 128-lane aligned

    # One fused sigmoid over the whole r/z slab (single EUP region).
    rz = jax.nn.sigmoid(vx[:, Dp:] + vrz)                         # (TB, 2*Dp)
    r = rz[:, :Dp]
    z = rz[:, Dp:]

    # Candidate state and blend.
    h_cand = jnp.tanh(
        jnp.dot((r * H).astype(mxu_dtype), wh_ref[...],
                preferred_element_type=jnp.float32)
        + vx_x)
    o_ref[...] = ((1.0 - z) * H + z * h_cand).astype(o_ref.dtype)


def _pad_chunks(a, n_chunks, d, dp):
    """Pad each d-wide chunk of the last dim to dp lanes: (..., n*d) -> (..., n*dp)."""
    rows = a.shape[0]
    a3 = a.reshape(rows, n_chunks, d)
    a3 = jnp.pad(a3, ((0, 0), (0, 0), (0, dp - d)))
    return a3.reshape(rows, n_chunks * dp)


def _weight_spec(block_shape, nbytes):
    # Constant index_map => block never changes across grid steps; for large
    # weights, skip the (useless) second pipeline buffer to halve resident
    # weight VMEM (matters most on v7x's 64 MiB VMEM).  Small weights keep the
    # default, most battle-tested pipelining path.
    if nbytes >= 8 * 1024 * 1024:
        return pl.BlockSpec(block_shape, lambda bt: (0, 0),
                            pipeline_mode=pl.Buffered(1))
    return pl.BlockSpec(block_shape, lambda bt: (0, 0))


def gru_embedding_forward(X, H, wx_weight, wrz, wh, bh, *, use_bf16_mxu=False):
    """X: (B,) int item indices; H: (B, D) float32 hidden state."""
    B, D = H.shape
    Dp = _round_up(D, LANE)

    # Batch tiling: one (TB, Dp) tile of H / Vx / out per grid step.
    # TB = 256 fills the 2x256x256 MXU on v6e/v7x; on v5e (4x128x128) 128 would
    # already fill it, but 256 simply runs as two MXU passes -- still fine.
    if B <= 256:
        TB = _round_up(B, SUBLANE)
    else:
        TB = 256
    B_pad = _round_up(B, TB)

    w_dtype = jnp.bfloat16 if use_bf16_mxu else jnp.float32

    # ---- parameter prep (one-time): pad each D-wide chunk to Dp lanes ------
    wrz_pad = jnp.pad(_pad_chunks(wrz, 2, D, Dp),
                      ((0, Dp - D), (0, 0))).astype(w_dtype)          # (Dp, 2*Dp)
    wh_pad = jnp.pad(wh, ((0, Dp - D), (0, Dp - D))).astype(w_dtype)  # (Dp, Dp)

    # ---- per-call activation prep ------------------------------------------
    # Embedding gather + bias fold in the wrapper (XLA gather on the dense
    # (V, 3*D) table), then lane-pad the gathered rows only.
    vx = wx_weight[X.astype(jnp.int32)] + bh                          # (B, 3*D)
    vx_pad = _pad_chunks(vx, 3, D, Dp)                                # (B, 3*Dp)
    vx_pad = jnp.pad(vx_pad, ((0, B_pad - B), (0, 0)))                # (B_pad, 3*Dp)
    H_pad = jnp.pad(H, ((0, B_pad - B), (0, Dp - D)))                 # (B_pad, Dp)

    # ---- VMEM budget: actual block bytes (2x pipeline buffers on activations,
    # 1-2x on weights depending on _weight_spec), clamped to a v7x-safe cap.
    wrz_bytes = Dp * 2 * Dp * wrz_pad.dtype.itemsize
    wh_bytes = Dp * Dp * wh_pad.dtype.itemsize
    act_bytes = (TB * Dp + TB * 3 * Dp + TB * Dp) * 4 * 2
    wgt_bytes = sum(b * (1 if b >= 8 * 1024 * 1024 else 2)
                    for b in (wrz_bytes, wh_bytes))
    vmem_limit = int(min(max(1.3 * (act_bytes + wgt_bytes), 32 * 1024 * 1024),
                         64 * 1024 * 1024))

    out = pl.pallas_call(
        gru_embedding_kernel,
        out_shape=jax.ShapeDtypeStruct((B_pad, Dp), jnp.float32),
        grid_spec=pltpu.PrefetchScalarGridSpec(
            num_scalar_prefetch=0,
            grid=(B_pad // TB,),
            in_specs=[
                pl.BlockSpec((TB, Dp), lambda bt: (bt, 0)),       # H tile
                pl.BlockSpec((TB, 3 * Dp), lambda bt: (bt, 0)),   # Vx tile (pipelined)
                _weight_spec((Dp, 2 * Dp), wrz_bytes),            # Wrz resident
                _weight_spec((Dp, Dp), wh_bytes),                 # Wh resident
            ],
            out_specs=pl.BlockSpec((TB, Dp), lambda bt: (bt, 0)),
        ),
        compiler_params=pltpu.CompilerParams(
            dimension_semantics=("parallel",),   # batch tiles shard across TCs (v7x)
            vmem_limit_bytes=vmem_limit,
        ),
    )(H_pad, vx_pad, wrz_pad, wh_pad)

    return out[:B, :D]


def init_parameter_matrix(key, shape, dim0_scale=1, dim1_scale=1):
    sigma = np.sqrt(6.0 / float(shape[0] / dim0_scale + shape[1] / dim1_scale))
    return jax.random.uniform(
        key, shape, dtype=jnp.float32, minval=-sigma, maxval=sigma
    )


def reference_forward(X, H, wx_weight, wrz, wh, bh):
    D = H.shape[1]
    hp = jax.lax.Precision.HIGHEST
    vx = wx_weight[X] + bh
    vrz = jnp.dot(H, wrz, precision=hp)
    vx_x, vx_r, vx_z = vx[:, :D], vx[:, D:2 * D], vx[:, 2 * D:]
    vh_r, vh_z = vrz[:, :D], vrz[:, D:]
    r = jax.nn.sigmoid(vx_r + vh_r)
    z = jax.nn.sigmoid(vx_z + vh_z)
    h = jnp.tanh(jnp.dot(r * H, wh, precision=hp) + vx_x)
    return (1.0 - z) * H + z * h


if __name__ == "__main__":
    dim_in = 50    # vocabulary (number of items)
    dim_out = 32   # hidden size
    B = 8          # batch

    key = jax.random.PRNGKey(0)
    k_wx, k_wrz, k_wh, k_x, k_h = jax.random.split(key, 5)

    # Parameter init (deterministic), matching reset_parameters():
    wx_weight = init_parameter_matrix(k_wx, (dim_in, dim_out * 3), dim1_scale=3)
    wrz = init_parameter_matrix(k_wrz, (dim_out, dim_out * 2), dim1_scale=2)
    wh = init_parameter_matrix(k_wh, (dim_out, dim_out), dim1_scale=1)
    bh = jnp.zeros((dim_out * 3,), dtype=jnp.float32)

    X = jax.random.randint(k_x, (B,), 0, dim_in, dtype=jnp.int32)
    H = jax.random.normal(k_h, (B, dim_out), dtype=jnp.float32)

    out = gru_embedding_forward(X, H, wx_weight, wrz, wh, bh)
    out = jax.block_until_ready(out)

    ref = reference_forward(X, H, wx_weight, wrz, wh, bh)
    np.testing.assert_allclose(np.asarray(out), np.asarray(ref),
                               rtol=1e-5, atol=1e-5)
    print("KERNEL_OK")
</pallas_src>

<mosaic_0001>
module attributes {stable_mosaic.version = 11 : i64} {
  func.func @gru_embedding_kernel(%arg0: i32, %arg1: memref<8x128xf32, #tpu.memory_space<vmem>>, %arg2: memref<8x384xf32, #tpu.memory_space<vmem>>, %arg3: memref<128x256xf32, #tpu.memory_space<vmem>>, %arg4: memref<128x128xf32, #tpu.memory_space<vmem>>, %arg5: memref<8x128xf32, #tpu.memory_space<vmem>>) attributes {dimension_semantics = [#tpu.dimension_semantics<parallel>], iteration_bounds = array<i64: 1>, scalar_prefetch = 0 : i64, scratch_operands = 0 : i64, tpu.core_type = #tpu.core_type<tc>, window_params = [{transform_indices = @transform_0, window_bounds = array<i64: 8, 128>}, {transform_indices = @transform_1, window_bounds = array<i64: 8, 384>}, {pipeline_mode = #tpu.pipeline_mode<synchronous>, transform_indices = @transform_2, window_bounds = array<i64: 128, 256>}, {pipeline_mode = #tpu.pipeline_mode<synchronous>, transform_indices = @transform_3, window_bounds = array<i64: 128, 128>}, {transform_indices = @transform_4, window_bounds = array<i64: 8, 128>}]} {
    %c0 = arith.constant 0 : index
    %c0_0 = arith.constant 0 : index
    %0 = vector.load %arg1[%c0, %c0_0] : memref<8x128xf32, #tpu.memory_space<vmem>>, vector<8x128xf32>
    %c0_1 = arith.constant 0 : index
    %c0_2 = arith.constant 0 : index
    %1 = vector.load %arg3[%c0_1, %c0_2] : memref<128x256xf32, #tpu.memory_space<vmem>>, vector<128x256xf32>
    %cst = arith.constant dense<0.000000e+00> : vector<8x256xf32>
    %2 = tpu.matmul %0, %1, %cst {dimension_numbers = #tpu.dot_dimension_numbers<[1], [0], [0], [1], [0, 0, 1, 1], [], []>} : vector<8x128xf32>, vector<128x256xf32>, vector<8x256xf32> -> vector<8x256xf32>
    %c0_3 = arith.constant 0 : index
    %c0_4 = arith.constant 0 : index
    %3 = vector.load %arg2[%c0_3, %c0_4] : memref<8x384xf32, #tpu.memory_space<vmem>>, vector<8x384xf32>
    %4 = vector.extract_strided_slice %3 {offsets = [0, 0], sizes = [8, 128], strides = [1, 1]} : vector<8x384xf32> to vector<8x128xf32>
    %5 = vector.extract_strided_slice %3 {offsets = [0, 128], sizes = [8, 256], strides = [1, 1]} : vector<8x384xf32> to vector<8x256xf32>
    %6 = arith.addf %5, %2 : vector<8x256xf32>
    %7 = arith.negf %6 : vector<8x256xf32>
    %8 = math.exp %7 : vector<8x256xf32>
    %cst_5 = arith.constant 1.000000e+00 : f32
    %9 = vector.broadcast %cst_5 : f32 to vector<8x256xf32>
    %10 = arith.addf %9, %8 : vector<8x256xf32>
    %11 = arith.divf %9, %10 : vector<8x256xf32>
    %12 = vector.extract_strided_slice %11 {offsets = [0, 0], sizes = [8, 128], strides = [1, 1]} : vector<8x256xf32> to vector<8x128xf32>
    %13 = vector.extract_strided_slice %11 {offsets = [0, 128], sizes = [8, 128], strides = [1, 1]} : vector<8x256xf32> to vector<8x128xf32>
    %14 = arith.mulf %12, %0 : vector<8x128xf32>
    %c0_6 = arith.constant 0 : index
    %c0_7 = arith.constant 0 : index
    %15 = vector.load %arg4[%c0_6, %c0_7] : memref<128x128xf32, #tpu.memory_space<vmem>>, vector<128x128xf32>
    %cst_8 = arith.constant dense<0.000000e+00> : vector<8x128xf32>
    %16 = tpu.matmul %14, %15, %cst_8 {dimension_numbers = #tpu.dot_dimension_numbers<[1], [0], [0], [1], [0, 0, 1, 1], [], []>} : vector<8x128xf32>, vector<128x128xf32>, vector<8x128xf32> -> vector<8x128xf32>
    %17 = arith.addf %16, %4 : vector<8x128xf32>
    %18 = math.tanh %17 : vector<8x128xf32>
    %cst_9 = arith.constant 1.000000e+00 : f32
    %19 = vector.broadcast %cst_9 : f32 to vector<8x128xf32>
    %20 = arith.subf %19, %13 : vector<8x128xf32>
    %21 = arith.mulf %20, %0 : vector<8x128xf32>
    %22 = arith.mulf %13, %18 : vector<8x128xf32>
    %23 = arith.addf %21, %22 : vector<8x128xf32>
    %c0_10 = arith.constant 0 : index
    %c0_11 = arith.constant 0 : index
    %24 = vector.load %arg5[%c0_10, %c0_11] : memref<8x128xf32, #tpu.memory_space<vmem>>, vector<8x128xf32>
    tpu.vector_store %arg5[%c0_10, %c0_11], %23 {strides = array<i32>} : memref<8x128xf32, #tpu.memory_space<vmem>>, vector<8x128xf32>,
    return
  }
  func.func @transform_0(%arg0: i32) -> (i32, i32) {
    %c0_i32 = arith.constant 0 : i32
    %c0_i32_0 = arith.constant 0 : i32
    return %arg0, %c0_i32 : i32, i32
  }
  func.func @transform_1(%arg0: i32) -> (i32, i32) {
    %c0_i32 = arith.constant 0 : i32
    %c0_i32_0 = arith.constant 0 : i32
    return %arg0, %c0_i32 : i32, i32
  }
  func.func @transform_2(%arg0: i32) -> (i32, i32) {
    %c0_i32 = arith.constant 0 : i32
    %c0_i32_0 = arith.constant 0 : i32
    %c0_i32_1 = arith.constant 0 : i32
    return %c0_i32, %c0_i32_0 : i32, i32
  }
  func.func @transform_3(%arg0: i32) -> (i32, i32) {
    %c0_i32 = arith.constant 0 : i32
    %c0_i32_0 = arith.constant 0 : i32
    %c0_i32_1 = arith.constant 0 : i32
    return %c0_i32, %c0_i32_0 : i32, i32
  }
  func.func @transform_4(%arg0: i32) -> (i32, i32) {
    %c0_i32 = arith.constant 0 : i32
    %c0_i32_0 = arith.constant 0 : i32
    return %arg0, %c0_i32 : i32, i32
  }
}

</mosaic_0001>

<llo_original>
// kernel: tpu_custom_call.1
$region0: #{tpu_custom_call.1}
  #allocation0 [shape = 'u32[]', space=smem, size = 0x4, offset = 0x4, fixed_abs, tag = 'smem constant byte address 0x4 - core index']
  #allocation1 [shape = 'u32[72,128]{1,0:T(1,128)}', space=vmem, size = 0x9000, scoped, tag = 'internal scratch']
  %s0 = inlined_call_operand.hbm [shape: f32[8,128], index: 0, kind: input, shape index: {}]
  %s1 = inlined_call_operand.hbm [shape: f32[8,384], index: 1, kind: input, shape index: {}]
  %s2 = inlined_call_operand.hbm [shape: f32[128,256], index: 2, kind: input, shape index: {}]
  %s3 = inlined_call_operand.hbm [shape: f32[128,128], index: 3, kind: input, shape index: {}]
  %s4 = inlined_call_operand.hbm [shape: f32[8,128], index: 4, kind: output, shape index: {}]
  %s5 = sld [smem:[#allocation0]]
  $region42: #{tpu_custom_call.1} parent=0
    _
  %s7 = ssub.s32 1, %s5
  %s8 = scalar_select 0, %s7, %s5
  $region1: #{tpu_custom_call.1} parent=0
    #allocation2 [shape = 'u8[4096]{0}', space=vmem, size = 0x1000, scoped, tag = 'input window, operand 0, single buffered']
    #allocation3 [shape = 's32[1]{0}', space=sflag, size = 0x4, scoped, tag = 'scoped memory for tpu_custom_call.1']
    #allocation4 [shape = 's32[1]{0}', space=sflag, size = 0x4, scoped, tag = 'scoped memory for tpu_custom_call.1']
    #allocation5 [shape = 'u8[12288]{0}', space=vmem, size = 0x3000, scoped, tag = 'input window, operand 1, single buffered']
    #allocation6 [shape = 's32[1]{0}', space=sflag, size = 0x4, scoped, tag = 'scoped memory for tpu_custom_call.1']
    #allocation7 [shape = 'u8[131072]{0}', space=vmem, size = 0x20000, scoped, tag = 'input window, operand 2, single buffered']
    #allocation8 [shape = 'u8[65536]{0}', space=vmem, size = 0x10000, scoped, tag = 'input window, operand 3, single buffered']
    #allocation9 [shape = 's32[1]{0}', space=sflag, size = 0x4, scoped, tag = 'scoped memory for tpu_custom_call.1']
    #allocation10 [shape = 'u8[4096]{0}', space=vmem, size = 0x1000, scoped, tag = 'output window, operand 0, single buffered']
    %9 = vsyncpa [#allocation3], 0
    %10 = vsyncpa [#allocation6], 0
    %11 = vsyncpa [#allocation9], 0
    %12 = vsyncpa [#allocation4], 0
    // Predicated region
    $region2: #{tpu_custom_call.1} parent=1 // pred_check
      _
    $region3: #{tpu_custom_call.1} parent=1 // pred_check_branch
      %14 = sbr.rel (0) target = $region5
    $region4: #{tpu_custom_call.1} parent=1 // pred_region
      %16 = vsyncadd [#allocation3], 0
      %s18 = sshll.u32 %s0, 4
      %s19 = int_to_ptr.hbm [resolvable:$true] %s18
      %s20 = sshll.u32 [#allocation2], 4
      %s21 = int_to_ptr.vmem [resolvable:$true] %s20
      %23 = dma.hbm_to_vmem [thread:$0]  %s19, 128, %s21, [#allocation3]
    $region5: #{tpu_custom_call.1} parent=1 // pred_fallthru
      _
    // Predicated region
    $region6: #{tpu_custom_call.1} parent=1 // pred_check
      _
    $region7: #{tpu_custom_call.1} parent=1 // pred_check_branch
      %25 = sbr.rel (0) target = $region9
    $region8: #{tpu_custom_call.1} parent=1 // pred_region
      %27 = vsyncadd [#allocation6], 0
      %s29 = sshll.u32 %s1, 4
      %s30 = int_to_ptr.hbm [resolvable:$true] %s29
      %s31 = sshll.u32 [#allocation5], 4
      %s32 = int_to_ptr.vmem [resolvable:$true] %s31
      %34 = dma.hbm_to_vmem [thread:$0]  %s30, 384, %s32, [#allocation6]
    $region9: #{tpu_custom_call.1} parent=1 // pred_fallthru
      _
    // Predicated region
    $region10: #{tpu_custom_call.1} parent=1 // pred_check
      _
    $region11: #{tpu_custom_call.1} parent=1 // pred_check_branch
      %36 = sbr.rel (0) target = $region13
    $region12: #{tpu_custom_call.1} parent=1 // pred_region
      %38 = vsyncadd [#allocation6], 0
      %s39 = sshll.u32 %s2, 4
      %s40 = int_to_ptr.hbm [resolvable:$true] %s39
      %s41 = sshll.u32 [#allocation7], 4
      %s42 = int_to_ptr.vmem [resolvable:$true] %s41
      %47 = dma.hbm_to_vmem [thread:$0]  %s40, 4096, %s42, [#allocation6], 256, 256, 16
    $region13: #{tpu_custom_call.1} parent=1 // pred_fallthru
      _
    // Predicated region
    $region14: #{tpu_custom_call.1} parent=1 // pred_check
      _
    $region15: #{tpu_custom_call.1} parent=1 // pred_check_branch
      %49 = sbr.rel (0) target = $region17
    $region16: #{tpu_custom_call.1} parent=1 // pred_region
      %51 = vsyncadd [#allocation9], 0
      %s52 = sshll.u32 %s3, 4
      %s53 = int_to_ptr.hbm [resolvable:$true] %s52
      %s54 = sshll.u32 [#allocation8], 4
      %s55 = int_to_ptr.vmem [resolvable:$true] %s54
      %60 = dma.hbm_to_vmem [thread:$0]  %s53, 2048, %s55, [#allocation9], 128, 128, 8
    $region17: #{tpu_custom_call.1} parent=1 // pred_fallthru
      _
    // Predicated region
    $region18: #{tpu_custom_call.1} parent=1 // pred_check
      _
    $region19: #{tpu_custom_call.1} parent=1 // pred_check_branch
      %62 = sbr.rel (0) target = $region21
    $region20: #{tpu_custom_call.1} parent=1 // pred_region
      %64 = dma.done [#allocation3], 128
    $region21: #{tpu_custom_call.1} parent=1 // pred_fallthru
      _
    // Predicated region
    $region22: #{tpu_custom_call.1} parent=1 // pred_check
      _
    $region23: #{tpu_custom_call.1} parent=1 // pred_check_branch
      %66 = sbr.rel (0) target = $region25
    $region24: #{tpu_custom_call.1} parent=1 // pred_region
      %68 = dma.done [#allocation6], 384
    $region25: #{tpu_custom_call.1} parent=1 // pred_fallthru
      _
    // Predicated region
    $region26: #{tpu_custom_call.1} parent=1 // pred_check
      _
    $region27: #{tpu_custom_call.1} parent=1 // pred_check_branch
      %70 = sbr.rel (0) target = $region29
    $region28: #{tpu_custom_call.1} parent=1 // pred_region
      %72 = dma.done [#allocation6], 4096
    $region29: #{tpu_custom_call.1} parent=1 // pred_fallthru
      _
    // Predicated region
    $region30: #{tpu_custom_call.1} parent=1 // pred_check
      _
    $region31: #{tpu_custom_call.1} parent=1 // pred_check_branch
      %74 = sbr.rel (0) target = $region33
    $region32: #{tpu_custom_call.1} parent=1 // pred_region
      %76 = dma.done [#allocation9], 2048
    $region33: #{tpu_custom_call.1} parent=1 // pred_fallthru
      _
    %v77 = vld [vmem:[#allocation2] sm:$0xff]
    %v78 = vld [vmem:[#allocation7] sm:$0xff]
    %v79 = vld [vmem:[#allocation7 + $0x8] sm:$0xff]
    %v80 = vld [vmem:[#allocation7 + $0x10] sm:$0xff]
    %v81 = vld [vmem:[#allocation7 + $0x18] sm:$0xff]
    %v82 = vld [vmem:[#allocation7 + $0x20] sm:$0xff]
    %v83 = vld [vmem:[#allocation7 + $0x28] sm:$0xff]
    %v84 = vld [vmem:[#allocation7 + $0x30] sm:$0xff]
    %v85 = vld [vmem:[#allocation7 + $0x38] sm:$0xff]
    %v86 = vld [vmem:[#allocation7 + $0x40] sm:$0xff]
    %v87 = vld [vmem:[#allocation7 + $0x48] sm:$0xff]
    %v88 = vld [vmem:[#allocation7 + $0x50] sm:$0xff]
    %v89 = vld [vmem:[#allocation7 + $0x58] sm:$0xff]
    %v90 = vld [vmem:[#allocation7 + $0x60] sm:$0xff]
    %v91 = vld [vmem:[#allocation7 + $0x68] sm:$0xff]
    %v92 = vld [vmem:[#allocation7 + $0x70] sm:$0xff]
    %v93 = vld [vmem:[#allocation7 + $0x78] sm:$0xff]
    %v94 = vld [vmem:[#allocation7 + $0x80] sm:$0xff]
    %v95 = vld [vmem:[#allocation7 + $0x88] sm:$0xff]
    %v96 = vld [vmem:[#allocation7 + $0x90] sm:$0xff]
    %v97 = vld [vmem:[#allocation7 + $0x98] sm:$0xff]
    %v98 = vld [vmem:[#allocation7 + $0xa0] sm:$0xff]
    %v99 = vld [vmem:[#allocation7 + $0xa8] sm:$0xff]
    %v100 = vld [vmem:[#allocation7 + $0xb0] sm:$0xff]
    %v101 = vld [vmem:[#allocation7 + $0xb8] sm:$0xff]
    %v102 = vld [vmem:[#allocation7 + $0xc0] sm:$0xff]
    %v103 = vld [vmem:[#allocation7 + $0xc8] sm:$0xff]
    %v104 = vld [vmem:[#allocation7 + $0xd0] sm:$0xff]
    %v105 = vld [vmem:[#allocation7 + $0xd8] sm:$0xff]
    %v106 = vld [vmem:[#allocation7 + $0xe0] sm:$0xff]
    %v107 = vld [vmem:[#allocation7 + $0xe8] sm:$0xff]
    %v108 = vld [vmem:[#allocation7 + $0xf0] sm:$0xff]
    %v109 = vld [vmem:[#allocation7 + $0xf8] sm:$0xff]
    %110 = vmatpush.msra.mxu0 %v108
    %111 = vmatpush.msra.mxu0 %v106
    %112 = vmatpush.msra.mxu0 %v104
    %113 = vmatpush.msra.mxu0 %v102
    %114 = vmatpush.msra.mxu0 %v100
    %115 = vmatpush.msra.mxu0 %v98
    %116 = vmatpush.msra.mxu0 %v96
    %117 = vmatpush.msra.mxu0 %v94
    %118 = vmatpush.msra.mxu0 %v92
    %119 = vmatpush.msra.mxu0 %v90
    %120 = vmatpush.msra.mxu0 %v88
    %121 = vmatpush.msra.mxu0 %v86
    %122 = vmatpush.msra.mxu0 %v84
    %123 = vmatpush.msra.mxu0 %v82
    %124 = vmatpush.msra.mxu0 %v80
    %125 = vmatpush.msra.mxu0 %v78
    %126 = vmatmul.f32.gmra.mxu0 %v77
    %v127 = vpop.f32.mrf.mxu0
    %v128 = vadd.f32 0.0, %v127
    %129 = vdwg.mxu0
    %130 = vmatpush.msra.mxu0 %v109
    %131 = vmatpush.msra.mxu0 %v107
    %132 = vmatpush.msra.mxu0 %v105
    %133 = vmatpush.msra.mxu0 %v103
    %134 = vmatpush.msra.mxu0 %v101
    %135 = vmatpush.msra.mxu0 %v99
    %136 = vmatpush.msra.mxu0 %v97
    %137 = vmatpush.msra.mxu0 %v95
    %138 = vmatpush.msra.mxu0 %v93
    %139 = vmatpush.msra.mxu0 %v91
    %140 = vmatpush.msra.mxu0 %v89
    %141 = vmatpush.msra.mxu0 %v87
    %142 = vmatpush.msra.mxu0 %v85
    %143 = vmatpush.msra.mxu0 %v83
    %144 = vmatpush.msra.mxu0 %v81
    %145 = vmatpush.msra.mxu0 %v79
    %146 = vmatmul.f32.gmra.mxu0 %v77
    %v147 = vpop.f32.mrf.mxu0
    %v148 = vadd.f32 0.0, %v147
    %149 = vdwg.mxu0
    %v150 = vld [vmem:[#allocation5] sm:$0xff]
    %v151 = vld [vmem:[#allocation5 + $0x8] sm:$0xff]
    %v152 = vld [vmem:[#allocation5 + $0x10] sm:$0xff]
    %v153 = vadd.f32 %v151, %v128
    %v154 = vadd.f32 %v152, %v148
    %v155 = vxor.u32 %v153, 2147483648
    %v156 = vxor.u32 %v154, 2147483648
    %v157 = vmul.f32 %v155, 1.442695
    %v158 = vpow.pop %v157
    %v159 = vmul.f32 %v156, 1.442695
    %v160 = vpow.pop %v159
    %v161 = vadd.f32 %v158, 1.0
    %v162 = vadd.f32 %v160, 1.0
    %v163 = vrcp.pop %v161
    %v164 = vmul.f32 %v161, %v163
    %v165 = vsub.f32 1.0, %v164
    %v166 = vmul.f32 %v163, %v165
    %v167 = vadd.f32 %v163, %v166
    %vm168 = vweird.f32 %v161
    %vm169 = vweird.f32 %v163
    %vm170 = vmor %vm168, %vm169
    %v171 = vsel %vm170, %v163, %v167
    %v172 = vand.u32 2147483647, %v161
    %vm173 = vcmp.eq.f32.partialorder %v172, 8.507059e+37
    %v174 = vand.u32 %v161, 2147483648
    %v175 = vor.u32 1.1754944e-38, %v174
    %v176 = vsel %vm173, %v175, %v171
    %v177 = vmul.f32 1.0, %v176
    %v178 = vrcp.pop %v162
    %v179 = vmul.f32 %v162, %v178
    %v180 = vsub.f32 1.0, %v179
    %v181 = vmul.f32 %v178, %v180
    %v182 = vadd.f32 %v178, %v181
    %vm183 = vweird.f32 %v162
    %vm184 = vweird.f32 %v178
    %vm185 = vmor %vm183, %vm184
    %v186 = vsel %vm185, %v178, %v182
    %v187 = vand.u32 2147483647, %v162
    %vm188 = vcmp.eq.f32.partialorder %v187, 8.507059e+37
    %v189 = vand.u32 %v162, 2147483648
    %v190 = vor.u32 1.1754944e-38, %v189
    %v191 = vsel %vm188, %v190, %v186
    %v192 = vmul.f32 1.0, %v191
    %v193 = vmul.f32 %v177, %v77
    %v194 = vld [vmem:[#allocation8] sm:$0xff]
    %v195 = vld [vmem:[#allocation8 + $0x8] sm:$0xff]
    %v196 = vld [vmem:[#allocation8 + $0x10] sm:$0xff]
    %v197 = vld [vmem:[#allocation8 + $0x18] sm:$0xff]
    %v198 = vld [vmem:[#allocation8 + $0x20] sm:$0xff]
    %v199 = vld [vmem:[#allocation8 + $0x28] sm:$0xff]
    %v200 = vld [vmem:[#allocation8 + $0x30] sm:$0xff]
    %v201 = vld [vmem:[#allocation8 + $0x38] sm:$0xff]
    %v202 = vld [vmem:[#allocation8 + $0x40] sm:$0xff]
    %v203 = vld [vmem:[#allocation8 + $0x48] sm:$0xff]
    %v204 = vld [vmem:[#allocation8 + $0x50] sm:$0xff]
    %v205 = vld [vmem:[#allocation8 + $0x58] sm:$0xff]
    %v206 = vld [vmem:[#allocation8 + $0x60] sm:$0xff]
    %v207 = vld [vmem:[#allocation8 + $0x68] sm:$0xff]
    %v208 = vld [vmem:[#allocation8 + $0x70] sm:$0xff]
    %v209 = vld [vmem:[#allocation8 + $0x78] sm:$0xff]
    %210 = vmatpush.msra.mxu0 %v209
    %211 = vmatpush.msra.mxu0 %v208
    %212 = vmatpush.msra.mxu0 %v207
    %213 = vmatpush.msra.mxu0 %v206
    %214 = vmatpush.msra.mxu0 %v205
    %215 = vmatpush.msra.mxu0 %v204
    %216 = vmatpush.msra.mxu0 %v203
    %217 = vmatpush.msra.mxu0 %v202
    %218 = vmatpush.msra.mxu0 %v201
    %219 = vmatpush.msra.mxu0 %v200
    %220 = vmatpush.msra.mxu0 %v199
    %221 = vmatpush.msra.mxu0 %v198
    %222 = vmatpush.msra.mxu0 %v197
    %223 = vmatpush.msra.mxu0 %v196
    %224 = vmatpush.msra.mxu0 %v195
    %225 = vmatpush.msra.mxu0 %v194
    %226 = vmatmul.f32.gmra.mxu0 %v193
    %v227 = vpop.f32.mrf.mxu0
    %v228 = vadd.f32 %v150, %v227
    %229 = vdwg.mxu0
    %v230 = vtanh.pop %v228
    %v231 = vsub.f32 1.0, %v192
    %v232 = vmul.f32 %v231, %v77
    %v233 = vmul.f32 %v192, %v230
    %v234 = vadd.f32 %v232, %v233
    %235 = vst [vmem:[#allocation10] sm:$0xff] %v234
    // Predicated region
    $region34: #{tpu_custom_call.1} parent=1 // pred_check
      _
    $region35: #{tpu_custom_call.1} parent=1 // pred_check_branch
      %237 = sbr.rel (0) target = $region37
    $region36: #{tpu_custom_call.1} parent=1 // pred_region
      %239 = vsyncadd [#allocation4], 0
      %s241 = sshll.u32 [#allocation10], 4
      %s242 = int_to_ptr.vmem [resolvable:$true] %s241
      %s243 = sshll.u32 %s4, 4
      %s244 = int_to_ptr.hbm [resolvable:$true] %s243
      %246 = dma.vmem_to_hbm [thread:$0]  %s242, 128, %s244, [#allocation4]
    $region37: #{tpu_custom_call.1} parent=1 // pred_fallthru
      _
    // Predicated region
    $region38: #{tpu_custom_call.1} parent=1 // pred_check
      _
    $region39: #{tpu_custom_call.1} parent=1 // pred_check_branch
      %248 = sbr.rel (0) target = $region41
    $region40: #{tpu_custom_call.1} parent=1 // pred_region
      %250 = dma.done [#allocation4], 128
    $region41: #{tpu_custom_call.1} parent=1 // pred_fallthru
      _
    %251 = vsyncpa [#allocation3], 1
    %252 = vsyncpa [#allocation6], 1
    %253 = vsyncpa [#allocation9], 1
    %254 = vsyncpa [#allocation4], 1

</llo_original>
